<compile_context>
chip_gen: v7x
topology: tpu7x:2x2x1
jax: 0.10.0
libtpu: 0.0.40
codegen_flags: <defaults>
</compile_context>

<pallas_src>
import functools

import jax
import jax.numpy as jnp
from jax.experimental import pallas as pl
from jax.experimental.pallas import tpu as pltpu

LANE = 128
TARGET_BLOCK_BYTES = 2 * 1024 * 1024  # ~2 MiB blocks (see header comment)


# ------------------------- Pallas kernels ---------------------------------

def _minmax_kernel(x_ref, min_ref, max_ref, min_acc, max_acc, *,
                   rows_per_blk, rows_total, needs_mask):
    """Global min/max: per-step VPU fold into a small (8, cols) f32 scratch;
    single cross-lane reduce + (1,1) store only on the last grid step."""
    i = pl.program_id(0)

    @pl.when(i == 0)
    def _init():
        min_acc[...] = jnp.full(min_acc.shape, jnp.inf, jnp.float32)
        max_acc[...] = jnp.full(max_acc.shape, -jnp.inf, jnp.float32)

    blk = x_ref[...].astype(jnp.float32)  # f32 reduction regardless of dtype
    if needs_mask:
        # Last (partial) block: rows past the end of the array hold garbage;
        # neutralize them with +/- inf.
        row = jax.lax.broadcasted_iota(jnp.int32, blk.shape, 0)
        valid = (i * rows_per_blk + row) < rows_total
        blk_lo = jnp.where(valid, blk, jnp.inf)
        blk_hi = jnp.where(valid, blk, -jnp.inf)
    else:
        blk_lo = blk
        blk_hi = blk

    r_blk, c = blk.shape
    if r_blk >= 8 and r_blk % 8 == 0:
        # VPU-only fold across vregs (leading axis of the (n, 8, cols) view).
        fold_lo = jnp.min(blk_lo.reshape(r_blk // 8, 8, c), axis=0)
        fold_hi = jnp.max(blk_hi.reshape(r_blk // 8, 8, c), axis=0)
    else:
        # Only reachable in the single-block (grid == 1) case; one XLU reduce.
        fold_lo = jnp.min(blk_lo, axis=0, keepdims=True)
        fold_hi = jnp.max(blk_hi, axis=0, keepdims=True)

    min_acc[...] = jnp.minimum(min_acc[...], fold_lo)
    max_acc[...] = jnp.maximum(max_acc[...], fold_hi)

    @pl.when(i == pl.num_programs(0) - 1)
    def _finalize():
        min_ref[...] = jnp.min(min_acc[...], keepdims=True)
        max_ref[...] = jnp.max(max_acc[...], keepdims=True)


def _quant_dequant_kernel(params_ref, x_ref, o_ref, *, nb, pb):
    """x_dq = delta * (clamp(round(x / delta) + zp, NB, PB) - zp)."""
    delta = params_ref[0]
    zp = params_ref[1]
    x = x_ref[...]
    # Keep the divide (not reciprocal) so rounding matches the reference exactly.
    x_q = jnp.clip(jnp.round(x / delta) + zp, nb, pb)
    o_ref[...] = (delta * (x_q - zp)).astype(o_ref.dtype)


# ------------------------- pallas_call wrappers ----------------------------

def _tensor_minmax_pallas(x2d, block_rows):
    r, c = x2d.shape
    grid = pl.cdiv(r, block_rows)
    needs_mask = (r % block_rows) != 0
    itemsize = x2d.dtype.itemsize
    kern = functools.partial(_minmax_kernel, rows_per_blk=block_rows,
                             rows_total=r, needs_mask=needs_mask)
    mn, mx = pl.pallas_call(
        kern,
        out_shape=(jax.ShapeDtypeStruct((1, 1), jnp.float32),
                   jax.ShapeDtypeStruct((1, 1), jnp.float32)),
        grid=(grid,),
        in_specs=[pl.BlockSpec((block_rows, c), lambda i: (i, 0))],
        out_specs=(pl.BlockSpec((1, 1), lambda i: (0, 0)),
                   pl.BlockSpec((1, 1), lambda i: (0, 0))),
        scratch_shapes=[pltpu.VMEM((8, c), jnp.float32),
                        pltpu.VMEM((8, c), jnp.float32)],
        compiler_params=pltpu.CompilerParams(
            dimension_semantics=("arbitrary",)),   # sequential accumulator
        cost_estimate=pl.CostEstimate(
            flops=2 * r * c, transcendentals=0,
            bytes_accessed=r * c * itemsize + 8),
    )(x2d)
    return mn[0, 0], mx[0, 0]


def _quant_dequant_pallas(x2d, params, nb, pb, block_rows):
    r, c = x2d.shape
    grid = pl.cdiv(r, block_rows)
    itemsize = x2d.dtype.itemsize
    kern = functools.partial(_quant_dequant_kernel, nb=float(nb), pb=float(pb))
    return pl.pallas_call(
        kern,
        out_shape=jax.ShapeDtypeStruct((r, c), x2d.dtype),
        grid=(grid,),
        in_specs=[
            pl.BlockSpec(memory_space=pltpu.MemorySpace.SMEM),   # (2,) scalars
            pl.BlockSpec((block_rows, c), lambda i: (i, 0)),
        ],
        out_specs=pl.BlockSpec((block_rows, c), lambda i: (i, 0)),
        compiler_params=pltpu.CompilerParams(
            dimension_semantics=("parallel",)),
        cost_estimate=pl.CostEstimate(
            flops=5 * r * c, transcendentals=0,
            bytes_accessed=2 * r * c * itemsize + 8),
    )(params, x2d)


# ------------------------- layout helpers ----------------------------------

def _pick_cols(total):
    for c in (1024, 512, 256, 128):
        if total % c == 0:
            return c
    return LANE  # ragged tail; will pad to a multiple of 128


def _pick_block_rows(rows, cols, itemsize):
    # Sublane multiple per dtype (f32:8, bf16:16, int8/fp8:32).
    sub = {4: 8, 2: 16, 1: 32}.get(itemsize, 8)
    target = (TARGET_BLOCK_BYTES // (cols * itemsize)) // sub * sub
    target = max(target, sub)
    if rows <= target:
        return rows            # single full-array block (always layout-legal)
    return target              # multiple of `sub`; last block may be partial


def _to_2d(x):
    """Flat (rows, cols) view; pads only if numel is not a multiple of 128."""
    total = int(x.size)
    flat = x.reshape(-1)
    cols = _pick_cols(total)
    padded_total = ((total + cols - 1) // cols) * cols
    padded = padded_total != total
    if padded:
        # Rare ragged case. Zero padding is exact for the MINMAX scaler because
        # minmax() clamps the range to include 0 anyway.
        flat = jnp.pad(flat, (0, padded_total - total))
    return flat.reshape(padded_total // cols, cols), total, padded


# ------------------------- module port -------------------------------------

class UniformAffineQuantizer:
    """JAX/Pallas port of the PyTorch UniformAffineQuantizer (MINMAX scaler,
    per-tensor). Default config: bits=8, symmetric=False, channel_wise=False,
    always_zero=False.

    Note: calibration state (delta/zero_point) is captured eagerly on the
    first call; do not wrap the first (init) call inside jax.jit.
    """

    def __init__(self, bits=8, symmetric=False, channel_wise=False,
                 always_zero=False):
        self.level = 2 ** bits
        self.symmetric = symmetric
        self.channel_wise = channel_wise
        self.always_zero = always_zero
        self.delta = None
        self.zero_point = None
        self.init = False

    def _params_from_minmax(self, x_min_raw, x_max_raw):
        # Scalar glue matching quant_layer.minmax exactly.
        x_min = jnp.minimum(x_min_raw, 0.0)
        x_max = jnp.maximum(x_max_raw, 0.0)
        delta = (x_max - x_min) / (self.level - 1)
        if self.symmetric:
            m = jnp.maximum(jnp.abs(x_min), x_max)
            x_min, x_max = -m, m
            delta = (x_max - x_min) / (self.level - 2)
        if self.always_zero:
            delta = x_max / (self.level - 1)
        delta = jnp.maximum(delta, 1e-8)
        if not (self.symmetric or self.always_zero):
            zero_point = jnp.round(-x_min / delta)
        else:
            zero_point = jnp.float32(0.0)
        return delta.astype(jnp.float32), zero_point.astype(jnp.float32)

    def __call__(self, x):
        orig_shape = x.shape
        # Build the 2D slab once and reuse it for calibration + quant pass.
        x2d, total, padded = _to_2d(x)
        rows, cols = x2d.shape
        block_rows = _pick_block_rows(rows, cols, x2d.dtype.itemsize)

        if not self.init:
            x_min_raw, x_max_raw = _tensor_minmax_pallas(x2d, block_rows)
            self.delta, self.zero_point = self._params_from_minmax(
                x_min_raw, x_max_raw)
            self.init = True

        if self.symmetric and not self.always_zero:
            nb, pb = -self.level // 2, self.level // 2 - 1
        else:
            nb, pb = 0, self.level - 1

        params = jnp.stack([self.delta, self.zero_point]).astype(jnp.float32)
        out2d = _quant_dequant_pallas(x2d, params, nb, pb, block_rows)

        if padded:
            return out2d.reshape(-1)[:total].reshape(orig_shape)
        return out2d.reshape(orig_shape)   # free metadata reshape


# ------------------------- reference (pure JAX) -----------------------------

def _reference(x, level=256):
    x_min = jnp.minimum(x.min(), 0.0)
    x_max = jnp.maximum(x.max(), 0.0)
    delta = jnp.maximum((x_max - x_min) / (level - 1), 1e-8)
    zp = jnp.round(-x_min / delta)
    x_q = jnp.clip(jnp.round(x / delta) + zp, 0, level - 1)
    return delta * (x_q - zp)


# ------------------------- demo ---------------------------------------------

if __name__ == "__main__":
    key = jax.random.PRNGKey(0)

    # NCHW conv activation (2048 elems -> (2, 1024) slab, single block, no pad).
    x = jax.random.normal(key, (2, 4, 16, 16), dtype=jnp.float32)
    quantizer = UniformAffineQuantizer(bits=8, symmetric=False,
                                       channel_wise=False, always_zero=False)
    out = quantizer(x)                      # init (calibration) + quant
    out = jax.block_until_ready(out)
    ref = _reference(x, level=quantizer.level)
    assert out.shape == x.shape and out.dtype == x.dtype
    assert jnp.allclose(out, ref, atol=1e-6, rtol=1e-6)

    # Steady-state (post-init) path reuses cached delta / zero_point.
    out2 = jax.block_until_ready(quantizer(x))
    assert jnp.allclose(out2, ref, atol=1e-6, rtol=1e-6)

    # Ragged shape (numel not a multiple of 128) exercises the pad path.
    x_odd = jax.random.normal(jax.random.PRNGKey(0), (3, 5, 7, 11),
                              dtype=jnp.float32)
    q_odd = UniformAffineQuantizer(bits=8)
    out_odd = jax.block_until_ready(q_odd(x_odd))
    ref_odd = _reference(x_odd, level=q_odd.level)
    assert out_odd.shape == x_odd.shape
    assert jnp.allclose(out_odd, ref_odd, atol=1e-6, rtol=1e-6)

    print("KERNEL_OK")
</pallas_src>

<mosaic_0001>
module attributes {stable_mosaic.version = 11 : i64} {
  func.func @_minmax_kernel(%arg0: i32, %arg1: memref<2x1024xf32, #tpu.memory_space<vmem>>, %arg2: memref<1x1xf32, #tpu.memory_space<vmem>>, %arg3: memref<1x1xf32, #tpu.memory_space<vmem>>, %arg4: memref<8x1024xf32, #tpu.memory_space<vmem>>, %arg5: memref<8x1024xf32, #tpu.memory_space<vmem>>) attributes {dimension_semantics = [#tpu.dimension_semantics<arbitrary>], iteration_bounds = array<i64: 1>, scalar_prefetch = 0 : i64, scratch_operands = 2 : i64, tpu.core_type = #tpu.core_type<tc>, window_params = [{transform_indices = @transform_0, window_bounds = array<i64: 2, 1024>}, {pipeline_mode = #tpu.pipeline_mode<synchronous>, transform_indices = @transform_1, window_bounds = array<i64: 1, 1>}, {pipeline_mode = #tpu.pipeline_mode<synchronous>, transform_indices = @transform_2, window_bounds = array<i64: 1, 1>}]} {
    %c0_i32 = arith.constant 0 : i32
    %0 = arith.cmpi eq, %arg0, %c0_i32 : i32
    %1 = arith.extui %0 : i1 to i32
    %c0_i32_0 = arith.constant 0 : i32
    %2 = arith.cmpi ne, %1, %c0_i32_0 : i32
    scf.if %2 {
      %cst_13 = arith.constant 0x7F800000 : f32
      %19 = vector.broadcast %cst_13 : f32 to vector<8x1024xf32>
      %c0_14 = arith.constant 0 : index
      %c0_15 = arith.constant 0 : index
      %20 = vector.load %arg4[%c0_14, %c0_15] : memref<8x1024xf32, #tpu.memory_space<vmem>>, vector<8x1024xf32>
      tpu.vector_store %arg4[%c0_14, %c0_15], %19 {strides = array<i32>} : memref<8x1024xf32, #tpu.memory_space<vmem>>, vector<8x1024xf32>,
      %cst_16 = arith.constant 0xFF800000 : f32
      %21 = vector.broadcast %cst_16 : f32 to vector<8x1024xf32>
      %c0_17 = arith.constant 0 : index
      %c0_18 = arith.constant 0 : index
      %22 = vector.load %arg5[%c0_17, %c0_18] : memref<8x1024xf32, #tpu.memory_space<vmem>>, vector<8x1024xf32>
      tpu.vector_store %arg5[%c0_17, %c0_18], %21 {strides = array<i32>} : memref<8x1024xf32, #tpu.memory_space<vmem>>, vector<8x1024xf32>,
    } else {
    }
    %c0 = arith.constant 0 : index
    %c0_1 = arith.constant 0 : index
    %3 = vector.load %arg1[%c0, %c0_1] : memref<2x1024xf32, #tpu.memory_space<vmem>>, vector<2x1024xf32>
    %cst = arith.constant dense<0x7F800000> : vector<1024xf32>
    %4 = vector.multi_reduction <minimumf>, %3, %cst [0] : vector<2x1024xf32> to vector<1024xf32>
    %5 = vector.shape_cast %4 : vector<1024xf32> to vector<1x1024xf32>
    %cst_2 = arith.constant dense<0xFF800000> : vector<1024xf32>
    %6 = vector.multi_reduction <maximumf>, %3, %cst_2 [0] : vector<2x1024xf32> to vector<1024xf32>
    %7 = vector.shape_cast %6 : vector<1024xf32> to vector<1x1024xf32>
    %c0_3 = arith.constant 0 : index
    %c0_4 = arith.constant 0 : index
    %8 = vector.load %arg4[%c0_3, %c0_4] : memref<8x1024xf32, #tpu.memory_space<vmem>>, vector<8x1024xf32>
    %9 = vector.broadcast %5 : vector<1x1024xf32> to vector<8x1024xf32>
    %10 = arith.minimumf %8, %9 : vector<8x1024xf32>
    %c0_5 = arith.constant 0 : index
    %c0_6 = arith.constant 0 : index
    %11 = vector.load %arg4[%c0_5, %c0_6] : memref<8x1024xf32, #tpu.memory_space<vmem>>, vector<8x1024xf32>
    tpu.vector_store %arg4[%c0_5, %c0_6], %10 {strides = array<i32>} : memref<8x1024xf32, #tpu.memory_space<vmem>>, vector<8x1024xf32>,
    %c0_7 = arith.constant 0 : index
    %c0_8 = arith.constant 0 : index
    %12 = vector.load %arg5[%c0_7, %c0_8] : memref<8x1024xf32, #tpu.memory_space<vmem>>, vector<8x1024xf32>
    %13 = vector.broadcast %7 : vector<1x1024xf32> to vector<8x1024xf32>
    %14 = arith.maximumf %12, %13 : vector<8x1024xf32>
    %c0_9 = arith.constant 0 : index
    %c0_10 = arith.constant 0 : index
    %15 = vector.load %arg5[%c0_9, %c0_10] : memref<8x1024xf32, #tpu.memory_space<vmem>>, vector<8x1024xf32>
    tpu.vector_store %arg5[%c0_9, %c0_10], %14 {strides = array<i32>} : memref<8x1024xf32, #tpu.memory_space<vmem>>, vector<8x1024xf32>,
    %c0_i32_11 = arith.constant 0 : i32
    %16 = arith.cmpi eq, %arg0, %c0_i32_11 : i32
    %17 = arith.extui %16 : i1 to i32
    %c0_i32_12 = arith.constant 0 : i32
    %18 = arith.cmpi ne, %17, %c0_i32_12 : i32
    scf.if %18 {
      %c0_13 = arith.constant 0 : index
      %c0_14 = arith.constant 0 : index
      %19 = vector.load %arg4[%c0_13, %c0_14] : memref<8x1024xf32, #tpu.memory_space<vmem>>, vector<8x1024xf32>
      %20 = vector.shape_cast %19 : vector<8x1024xf32> to vector<1x8x1024xf32>
      %cst_15 = arith.constant dense<0x7F800000> : vector<1xf32>
      %21 = vector.multi_reduction <minimumf>, %20, %cst_15 [1, 2] : vector<1x8x1024xf32> to vector<1xf32>
      %22 = vector.shape_cast %21 : vector<1xf32> to vector<1x1x1xf32>
      %23 = vector.extract %22[0, 0, 0] : f32 from vector<1x1x1xf32>
      %24 = vector.broadcast %23 : f32 to vector<1x1xf32>
      %c0_16 = arith.constant 0 : index
      %c0_17 = arith.constant 0 : index
      %25 = vector.load %arg2[%c0_16, %c0_17] : memref<1x1xf32, #tpu.memory_space<vmem>>, vector<1x1xf32>
      tpu.vector_store %arg2[%c0_16, %c0_17], %24 {strides = array<i32>} : memref<1x1xf32, #tpu.memory_space<vmem>>, vector<1x1xf32>,
      %c0_18 = arith.constant 0 : index
      %c0_19 = arith.constant 0 : index
      %26 = vector.load %arg5[%c0_18, %c0_19] : memref<8x1024xf32, #tpu.memory_space<vmem>>, vector<8x1024xf32>
      %27 = vector.shape_cast %26 : vector<8x1024xf32> to vector<1x8x1024xf32>
      %cst_20 = arith.constant dense<0xFF800000> : vector<1xf32>
      %28 = vector.multi_reduction <maximumf>, %27, %cst_20 [1, 2] : vector<1x8x1024xf32> to vector<1xf32>
      %29 = vector.shape_cast %28 : vector<1xf32> to vector<1x1x1xf32>
      %30 = vector.extract %29[0, 0, 0] : f32 from vector<1x1x1xf32>
      %31 = vector.broadcast %30 : f32 to vector<1x1xf32>
      %c0_21 = arith.constant 0 : index
      %c0_22 = arith.constant 0 : index
      %32 = vector.load %arg3[%c0_21, %c0_22] : memref<1x1xf32, #tpu.memory_space<vmem>>, vector<1x1xf32>
      tpu.vector_store %arg3[%c0_21, %c0_22], %31 {strides = array<i32>} : memref<1x1xf32, #tpu.memory_space<vmem>>, vector<1x1xf32>,
    } else {
    }
    return
  }
  func.func @transform_0(%arg0: i32) -> (i32, i32) {
    %c0_i32 = arith.constant 0 : i32
    %c0_i32_0 = arith.constant 0 : i32
    return %arg0, %c0_i32 : i32, i32
  }
  func.func @transform_1(%arg0: i32) -> (i32, i32) {
    %c0_i32 = arith.constant 0 : i32
    %c0_i32_0 = arith.constant 0 : i32
    %c0_i32_1 = arith.constant 0 : i32
    return %c0_i32, %c0_i32_0 : i32, i32
  }
  func.func @transform_2(%arg0: i32) -> (i32, i32) {
    %c0_i32 = arith.constant 0 : i32
    %c0_i32_0 = arith.constant 0 : i32
    %c0_i32_1 = arith.constant 0 : i32
    return %c0_i32, %c0_i32_0 : i32, i32
  }
}

</mosaic_0001>

<llo_original>
// kernel: tpu_custom_call.1
$region0: #{tpu_custom_call.1}
  #allocation0 [shape = 'u32[]', space=smem, size = 0x4, offset = 0x4, fixed_abs, tag = 'smem constant byte address 0x4 - core index']
  #allocation1 [shape = 'u32[144,128]{1,0:T(1,128)}', space=vmem, size = 0x12000, scoped, tag = 'internal scratch']
  #allocation2 [shape = 'f32[8,1024]{1,0:T(8,128)}', space=vmem, size = 0x8000, scoped, tag = 'scratch operand']
  #allocation3 [shape = 'f32[8,1024]{1,0:T(8,128)}', space=vmem, size = 0x8000, scoped, tag = 'scratch operand']
  %s0 = inlined_call_operand.hbm [shape: f32[2,1024], index: 0, kind: input, shape index: {}]
  %s1 = inlined_call_operand.hbm [shape: f32[1,1], index: 1, kind: output, shape index: {0}]
  %s2 = inlined_call_operand.hbm [shape: f32[1,1], index: 2, kind: output, shape index: {1}]
  %3 = xla_tuple %s1, %s2
  %s4 = sld [smem:[#allocation0]]
  $region34: #{tpu_custom_call.1} parent=0
    _
  %s6 = ssub.s32 1, %s4
  %s7 = scalar_select 0, %s6, %s4
  $region1: #{tpu_custom_call.1} parent=0
    #allocation4 [shape = 'u8[8192]{0}', space=vmem, size = 0x2000, scoped, tag = 'input window, operand 0, single buffered']
    #allocation5 [shape = 's32[1]{0}', space=sflag, size = 0x4, scoped, tag = 'scoped memory for tpu_custom_call.1']
    #allocation6 [shape = 's32[1]{0}', space=sflag, size = 0x4, scoped, tag = 'scoped memory for tpu_custom_call.1']
    #allocation7 [shape = 'u8[512]{0}', space=vmem, size = 0x400, scoped, tag = 'output window, operand 0, single buffered']
    #allocation8 [shape = 'u8[512]{0}', space=vmem, size = 0x400, scoped, tag = 'output window, operand 1, single buffered']
    #allocation9 [shape = 's32[1]{0}', space=sflag, size = 0x4, scoped, tag = 'scoped memory for tpu_custom_call.1']
    %8 = vsyncpa [#allocation5], 0
    %9 = vsyncpa [#allocation6], 0
    %10 = vsyncpa [#allocation9], 0
    // Predicated region
    $region2: #{tpu_custom_call.1} parent=1 // pred_check
      _
    $region3: #{tpu_custom_call.1} parent=1 // pred_check_branch
      %12 = sbr.rel (0) target = $region5
    $region4: #{tpu_custom_call.1} parent=1 // pred_region
      %s14 = ssub.s32 256, 256
      %15 = vsyncadd [#allocation5], %s14
      %s17 = sshll.u32 [#allocation4], 4
      %s18 = int_to_ptr.vmem [resolvable:$true] %s17
      %20 = dma.hbm_to_vmem [thread:$0]  %s0, 256, %s18, [#allocation5]
    $region5: #{tpu_custom_call.1} parent=1 // pred_fallthru
      _
    // Predicated region
    $region6: #{tpu_custom_call.1} parent=1 // pred_check
      _
    $region7: #{tpu_custom_call.1} parent=1 // pred_check_branch
      %22 = sbr.rel (0) target = $region9
    $region8: #{tpu_custom_call.1} parent=1 // pred_region
      %23 = dma.done [#allocation5], 256
    $region9: #{tpu_custom_call.1} parent=1 // pred_fallthru
      _
    %p24 = scmp.eq.s32.totalorder 0, 0
    // Predicated region
    $region10: #{tpu_custom_call.1} parent=1 // pred_check
      %p25 = pneg %p24
    $region11: #{tpu_custom_call.1} parent=1 // pred_check_branch
      %27 = sbr.rel (%p25) target = $region13
    $region12: #{tpu_custom_call.1} parent=1 // pred_region
      %28 = vst [vmem:[#allocation2] sm:$0xff] inf
      %29 = vst [vmem:[#allocation2 + $0x8] sm:$0xff] inf
      %30 = vst [vmem:[#allocation2 + $0x10] sm:$0xff] inf
      %31 = vst [vmem:[#allocation2 + $0x18] sm:$0xff] inf
      %32 = vst [vmem:[#allocation2 + $0x20] sm:$0xff] inf
      %33 = vst [vmem:[#allocation2 + $0x28] sm:$0xff] inf
      %34 = vst [vmem:[#allocation2 + $0x30] sm:$0xff] inf
      %35 = vst [vmem:[#allocation2 + $0x38] sm:$0xff] inf
      %36 = vst [vmem:[#allocation3] sm:$0xff] -inf
      %37 = vst [vmem:[#allocation3 + $0x8] sm:$0xff] -inf
      %38 = vst [vmem:[#allocation3 + $0x10] sm:$0xff] -inf
      %39 = vst [vmem:[#allocation3 + $0x18] sm:$0xff] -inf
      %40 = vst [vmem:[#allocation3 + $0x20] sm:$0xff] -inf
      %41 = vst [vmem:[#allocation3 + $0x28] sm:$0xff] -inf
      %42 = vst [vmem:[#allocation3 + $0x30] sm:$0xff] -inf
      %43 = vst [vmem:[#allocation3 + $0x38] sm:$0xff] -inf
    $region13: #{tpu_custom_call.1} parent=1 // pred_fallthru
      _
    %v44 = vld [vmem:[#allocation4] sm:$0xff]
    %v45 = vld [vmem:[#allocation4 + $0x8] sm:$0xff]
    %v48 = vcombine.high %v44, %v44
    %v50 = vunpack.c.l.s4 1983009808
    %v51 = vunpack.c.0.s8 %v50
    %v52 = vlaneseq
    %v53 = vshrl.u32 %v52, 7
    %v54 = vsub.s32 %v51, %v53
    %v55 = vrot.slane %v44, %v54
    %v57 = vunpack.c.l.s4 1983009808
    %v58 = vunpack.c.0.s8 %v57
    %v59 = vlaneseq
    %v60 = vshrl.u32 %v59, 7
    %v61 = vsub.s32 %v58, %v60
    %v62 = vrot.slane %v48, %v61
    %v63 = vcombine.high %v55, %v55
    %v64 = vcombine.high %v62, %v62
    %v65 = vcombine.high %v45, %v45
    %v67 = vunpack.c.l.s4 1983009808
    %v68 = vunpack.c.0.s8 %v67
    %v69 = vlaneseq
    %v70 = vshrl.u32 %v69, 7
    %v71 = vsub.s32 %v68, %v70
    %v72 = vrot.slane %v45, %v71
    %v74 = vunpack.c.l.s4 1983009808
    %v75 = vunpack.c.0.s8 %v74
    %v76 = vlaneseq
    %v77 = vshrl.u32 %v76, 7
    %v78 = vsub.s32 %v75, %v77
    %v79 = vrot.slane %v65, %v78
    %v80 = vcombine.high %v72, %v72
    %v81 = vcombine.high %v79, %v79
    %vm90 = vcmask 1041408
    %v91 = vsel %vm90, %v55, inf
    %v92 = vrot.slane %v91, 4
    %v93 = vmin.f32 %v91, %v92
    %v94 = vrot.slane %v93, 2
    %v95 = vmin.f32 %v93, %v94
    %v96 = vrot.slane %v95, 1
    %v97 = vmin.f32 %v95, %v96
    %v98 = vsel %vm90, %v63, inf
    %v99 = vrot.slane %v98, 4
    %v100 = vmin.f32 %v98, %v99
    %v101 = vrot.slane %v100, 2
    %v102 = vmin.f32 %v100, %v101
    %v103 = vrot.slane %v102, 1
    %v104 = vmin.f32 %v102, %v103
    %v105 = vsel %vm90, %v62, inf
    %v106 = vrot.slane %v105, 4
    %v107 = vmin.f32 %v105, %v106
    %v108 = vrot.slane %v107, 2
    %v109 = vmin.f32 %v107, %v108
    %v110 = vrot.slane %v109, 1
    %v111 = vmin.f32 %v109, %v110
    %v112 = vsel %vm90, %v64, inf
    %v113 = vrot.slane %v112, 4
    %v114 = vmin.f32 %v112, %v113
    %v115 = vrot.slane %v114, 2
    %v116 = vmin.f32 %v114, %v115
    %v117 = vrot.slane %v116, 1
    %v118 = vmin.f32 %v116, %v117
    %v119 = vsel %vm90, %v72, inf
    %v120 = vrot.slane %v119, 4
    %v121 = vmin.f32 %v119, %v120
    %v122 = vrot.slane %v121, 2
    %v123 = vmin.f32 %v121, %v122
    %v124 = vrot.slane %v123, 1
    %v125 = vmin.f32 %v123, %v124
    %v126 = vsel %vm90, %v80, inf
    %v127 = vrot.slane %v126, 4
    %v128 = vmin.f32 %v126, %v127
    %v129 = vrot.slane %v128, 2
    %v130 = vmin.f32 %v128, %v129
    %v131 = vrot.slane %v130, 1
    %v132 = vmin.f32 %v130, %v131
    %v133 = vsel %vm90, %v79, inf
    %v134 = vrot.slane %v133, 4
    %v135 = vmin.f32 %v133, %v134
    %v136 = vrot.slane %v135, 2
    %v137 = vmin.f32 %v135, %v136
    %v138 = vrot.slane %v137, 1
    %v139 = vmin.f32 %v137, %v138
    %v140 = vsel %vm90, %v81, inf
    %v141 = vrot.slane %v140, 4
    %v142 = vmin.f32 %v140, %v141
    %v143 = vrot.slane %v142, 2
    %v144 = vmin.f32 %v142, %v143
    %v145 = vrot.slane %v144, 1
    %v146 = vmin.f32 %v144, %v145
    %v147 = vsel %vm90, %v55, -inf
    %v148 = vrot.slane %v147, 4
    %v149 = vmax.f32 %v147, %v148
    %v150 = vrot.slane %v149, 2
    %v151 = vmax.f32 %v149, %v150
    %v152 = vrot.slane %v151, 1
    %v153 = vmax.f32 %v151, %v152
    %v154 = vsel %vm90, %v63, -inf
    %v155 = vrot.slane %v154, 4
    %v156 = vmax.f32 %v154, %v155
    %v157 = vrot.slane %v156, 2
    %v158 = vmax.f32 %v156, %v157
    %v159 = vrot.slane %v158, 1
    %v160 = vmax.f32 %v158, %v159
    %v161 = vsel %vm90, %v62, -inf
    %v162 = vrot.slane %v161, 4
    %v163 = vmax.f32 %v161, %v162
    %v164 = vrot.slane %v163, 2
    %v165 = vmax.f32 %v163, %v164
    %v166 = vrot.slane %v165, 1
    %v167 = vmax.f32 %v165, %v166
    %v168 = vsel %vm90, %v64, -inf
    %v169 = vrot.slane %v168, 4
    %v170 = vmax.f32 %v168, %v169
    %v171 = vrot.slane %v170, 2
    %v172 = vmax.f32 %v170, %v171
    %v173 = vrot.slane %v172, 1
    %v174 = vmax.f32 %v172, %v173
    %v175 = vsel %vm90, %v72, -inf
    %v176 = vrot.slane %v175, 4
    %v177 = vmax.f32 %v175, %v176
    %v178 = vrot.slane %v177, 2
    %v179 = vmax.f32 %v177, %v178
    %v180 = vrot.slane %v179, 1
    %v181 = vmax.f32 %v179, %v180
    %v182 = vsel %vm90, %v80, -inf
    %v183 = vrot.slane %v182, 4
    %v184 = vmax.f32 %v182, %v183
    %v185 = vrot.slane %v184, 2
    %v186 = vmax.f32 %v184, %v185
    %v187 = vrot.slane %v186, 1
    %v188 = vmax.f32 %v186, %v187
    %v189 = vsel %vm90, %v79, -inf
    %v190 = vrot.slane %v189, 4
    %v191 = vmax.f32 %v189, %v190
    %v192 = vrot.slane %v191, 2
    %v193 = vmax.f32 %v191, %v192
    %v194 = vrot.slane %v193, 1
    %v195 = vmax.f32 %v193, %v194
    %v196 = vsel %vm90, %v81, -inf
    %v197 = vrot.slane %v196, 4
    %v198 = vmax.f32 %v196, %v197
    %v199 = vrot.slane %v198, 2
    %v200 = vmax.f32 %v198, %v199
    %v201 = vrot.slane %v200, 1
    %v202 = vmax.f32 %v200, %v201
    %v203 = vld [vmem:[#allocation2] sm:$0xff]
    %v204 = vld [vmem:[#allocation2 + $0x8] sm:$0xff]
    %v205 = vld [vmem:[#allocation2 + $0x10] sm:$0xff]
    %v206 = vld [vmem:[#allocation2 + $0x18] sm:$0xff]
    %v207 = vld [vmem:[#allocation2 + $0x20] sm:$0xff]
    %v208 = vld [vmem:[#allocation2 + $0x28] sm:$0xff]
    %v209 = vld [vmem:[#allocation2 + $0x30] sm:$0xff]
    %v210 = vld [vmem:[#allocation2 + $0x38] sm:$0xff]
    %v211 = vmin.f32 %v203, %v97
    %v212 = vmin.f32 %v204, %v104
    %v213 = vmin.f32 %v205, %v111
    %v214 = vmin.f32 %v206, %v118
    %v215 = vmin.f32 %v207, %v125
    %v216 = vmin.f32 %v208, %v132
    %v217 = vmin.f32 %v209, %v139
    %v218 = vmin.f32 %v210, %v146
    %219 = vst [vmem:[#allocation2] sm:$0xff] %v211
    %220 = vst [vmem:[#allocation2 + $0x8] sm:$0xff] %v212
    %221 = vst [vmem:[#allocation2 + $0x10] sm:$0xff] %v213
    %222 = vst [vmem:[#allocation2 + $0x18] sm:$0xff] %v214
    %223 = vst [vmem:[#allocation2 + $0x20] sm:$0xff] %v215
    %224 = vst [vmem:[#allocation2 + $0x28] sm:$0xff] %v216
    %225 = vst [vmem:[#allocation2 + $0x30] sm:$0xff] %v217
    %226 = vst [vmem:[#allocation2 + $0x38] sm:$0xff] %v218
    %v227 = vld [vmem:[#allocation3] sm:$0xff]
    %v228 = vld [vmem:[#allocation3 + $0x8] sm:$0xff]
    %v229 = vld [vmem:[#allocation3 + $0x10] sm:$0xff]
    %v230 = vld [vmem:[#allocation3 + $0x18] sm:$0xff]
    %v231 = vld [vmem:[#allocation3 + $0x20] sm:$0xff]
    %v232 = vld [vmem:[#allocation3 + $0x28] sm:$0xff]
    %v233 = vld [vmem:[#allocation3 + $0x30] sm:$0xff]
    %v234 = vld [vmem:[#allocation3 + $0x38] sm:$0xff]
    %v235 = vmax.f32 %v227, %v153
    %v236 = vmax.f32 %v228, %v160
    %v237 = vmax.f32 %v229, %v167
    %v238 = vmax.f32 %v230, %v174
    %v239 = vmax.f32 %v231, %v181
    %v240 = vmax.f32 %v232, %v188
    %v241 = vmax.f32 %v233, %v195
    %v242 = vmax.f32 %v234, %v202
    %243 = vst [vmem:[#allocation3] sm:$0xff] %v235
    %244 = vst [vmem:[#allocation3 + $0x8] sm:$0xff] %v236
    %245 = vst [vmem:[#allocation3 + $0x10] sm:$0xff] %v237
    %246 = vst [vmem:[#allocation3 + $0x18] sm:$0xff] %v238
    %247 = vst [vmem:[#allocation3 + $0x20] sm:$0xff] %v239
    %248 = vst [vmem:[#allocation3 + $0x28] sm:$0xff] %v240
    %249 = vst [vmem:[#allocation3 + $0x30] sm:$0xff] %v241
    %250 = vst [vmem:[#allocation3 + $0x38] sm:$0xff] %v242
    // Predicated region
    $region14: #{tpu_custom_call.1} parent=1 // pred_check
      %p251 = pneg %p24
    $region15: #{tpu_custom_call.1} parent=1 // pred_check_branch
      %253 = sbr.rel (%p251) target = $region17
    $region16: #{tpu_custom_call.1} parent=1 // pred_region
      %v254 = vld [vmem:[#allocation2] sm:$0xff]
      %v255 = vld [vmem:[#allocation2 + $0x8] sm:$0xff]
      %v256 = vld [vmem:[#allocation2 + $0x10] sm:$0xff]
      %v257 = vld [vmem:[#allocation2 + $0x18] sm:$0xff]
      %v258 = vld [vmem:[#allocation2 + $0x20] sm:$0xff]
      %v259 = vld [vmem:[#allocation2 + $0x28] sm:$0xff]
      %v260 = vld [vmem:[#allocation2 + $0x30] sm:$0xff]
      %v261 = vld [vmem:[#allocation2 + $0x38] sm:$0xff]
      %v262 = vmin.f32 %v254, %v258
      %v263 = vmin.f32 %v255, %v259
      %v264 = vmin.f32 %v256, %v260
      %v265 = vmin.f32 %v257, %v261
      %v266 = vmin.f32 %v262, %v263
      %v267 = vmin.f32 %v264, %v265
      %v268 = vmin.f32 %v266, %v267
      %269 = vmin.xlane.f32.xlu0 %v268
      %v270 = vpop.xlane.xlu0 %269
      %v271 = vrot.slane %v270, 4
      %v272 = vmin.f32 %v270, %v271
      %v273 = vrot.slane %v272, 2
      %v274 = vmin.f32 %v272, %v273
      %v275 = vrot.slane %v274, 1
      %v276 = vmin.f32 %v274, %v275
      %s277 = vtos %v276
      %v278 = vstv %s277
      %vm279 = vcmask 0
      %280 = vst.msk [vmem:[#allocation7] sm:$0x1] %vm279, %v278
      %v281 = vld [vmem:[#allocation3] sm:$0xff]
      %v282 = vld [vmem:[#allocation3 + $0x8] sm:$0xff]
      %v283 = vld [vmem:[#allocation3 + $0x10] sm:$0xff]
      %v284 = vld [vmem:[#allocation3 + $0x18] sm:$0xff]
      %v285 = vld [vmem:[#allocation3 + $0x20] sm:$0xff]
      %v286 = vld [vmem:[#allocation3 + $0x28] sm:$0xff]
      %v287 = vld [vmem:[#allocation3 + $0x30] sm:$0xff]
      %v288 = vld [vmem:[#allocation3 + $0x38] sm:$0xff]
      %v289 = vmax.f32 %v281, %v285
      %v290 = vmax.f32 %v282, %v286
      %v291 = vmax.f32 %v283, %v287
      %v292 = vmax.f32 %v284, %v288
      %v293 = vmax.f32 %v289, %v290
      %v294 = vmax.f32 %v291, %v292
      %v295 = vmax.f32 %v293, %v294
      %296 = vmax.xlane.f32.xlu0 %v295
      %v297 = vpop.xlane.xlu0 %296
      %v298 = vrot.slane %v297, 4
      %v299 = vmax.f32 %v297, %v298
      %v300 = vrot.slane %v299, 2
      %v301 = vmax.f32 %v299, %v300
      %v302 = vrot.slane %v301, 1
      %v303 = vmax.f32 %v301, %v302
      %s304 = vtos %v303
      %v305 = vstv %s304
      %306 = vst.msk [vmem:[#allocation8] sm:$0x1] %vm279, %v305
    $region17: #{tpu_custom_call.1} parent=1 // pred_fallthru
      _
    // Predicated region
    $region18: #{tpu_custom_call.1} parent=1 // pred_check
      _
    $region19: #{tpu_custom_call.1} parent=1 // pred_check_branch
      %308 = sbr.rel (0) target = $region21
    $region20: #{tpu_custom_call.1} parent=1 // pred_region
      %s310 = ssub.s32 16, 16
      %311 = vsyncadd [#allocation6], %s310
      %s313 = sshll.u32 [#allocation7], 4
      %s314 = int_to_ptr.vmem [resolvable:$true] %s313
      %316 = dma.vmem_to_hbm [thread:$0]  %s314, 16, %s1, [#allocation6]
    $region21: #{tpu_custom_call.1} parent=1 // pred_fallthru
      _
    // Predicated region
    $region22: #{tpu_custom_call.1} parent=1 // pred_check
      _
    $region23: #{tpu_custom_call.1} parent=1 // pred_check_branch
      %318 = sbr.rel (0) target = $region25
    $region24: #{tpu_custom_call.1} parent=1 // pred_region
      %s320 = ssub.s32 16, 16
      %321 = vsyncadd [#allocation9], %s320
      %s323 = sshll.u32 [#allocation8], 4
      %s324 = int_to_ptr.vmem [resolvable:$true] %s323
      %326 = dma.vmem_to_hbm [thread:$0]  %s324, 16, %s2, [#allocation9]
    $region25: #{tpu_custom_call.1} parent=1 // pred_fallthru
      _
    // Predicated region
    $region26: #{tpu_custom_call.1} parent=1 // pred_check
      _
    $region27: #{tpu_custom_call.1} parent=1 // pred_check_branch
      %328 = sbr.rel (0) target = $region29
    $region28: #{tpu_custom_call.1} parent=1 // pred_region
      %329 = dma.done [#allocation6], 16
    $region29: #{tpu_custom_call.1} parent=1 // pred_fallthru
      _
    // Predicated region
    $region30: #{tpu_custom_call.1} parent=1 // pred_check
      _
    $region31: #{tpu_custom_call.1} parent=1 // pred_check_branch
      %331 = sbr.rel (0) target = $region33
    $region32: #{tpu_custom_call.1} parent=1 // pred_region
      %332 = dma.done [#allocation9], 16
    $region33: #{tpu_custom_call.1} parent=1 // pred_fallthru
      _
    %333 = vsyncpa [#allocation5], 1
    %334 = vsyncpa [#allocation6], 1
    %335 = vsyncpa [#allocation9], 1

</llo_original>
